<compile_context>
chip_gen: v6e
topology: v6e:2x2x1
jax: 0.10.0
libtpu: 0.0.40
codegen_flags: <defaults>
</compile_context>

<pallas_src>
import functools

import jax
import jax.numpy as jnp
import numpy as np
from jax import lax
from jax.experimental import pallas as pl
from jax.experimental.pallas import tpu as pltpu


def _round_up(x, m):
    return (x + m - 1) // m * m


def _normalize_rows(x):
    # F.normalize(x, dim=1): x / max(||x||, 1e-12) == x * rsqrt(max(||x||^2, 1e-24))
    ss = jnp.sum(x * x, axis=1, keepdims=True)
    return x * lax.rsqrt(jnp.maximum(ss, 1e-24))


def _ntxent_kernel(zi_ref, zj_ref, zc_ref, loss_ref,
                   z_s, a_s, acc, *, inv_t, num_pad_cols):
    """One row tile (TB rows of each half) vs one column tile (TC stacked rows).

    zi_ref, zj_ref : (TB, Dp) f32, already row-normalized.
    zc_ref         : (TC, Dp) matmul dtype, already normalized AND scaled by 1/t.
    loss_ref       : (TB, 1)  combined loss of global rows r and r+B.
    z_s            : (2TB, Dp) f32 scratch  (stacked normalized rows).
    a_s            : (2TB, Dp) matmul-dtype scratch (MXU LHS).
    acc            : (2TB, 1)  f32 running exp-row-sums.
    """
    c = pl.program_id(1)
    TB = zi_ref.shape[0]

    @pl.when(c == 0)
    def _init():
        zi = zi_ref[...]
        zj = zj_ref[...]
        z_s[0:TB, :] = zi
        z_s[TB:2 * TB, :] = zj
        a_s[0:TB, :] = zi.astype(a_s.dtype)
        a_s[TB:2 * TB, :] = zj.astype(a_s.dtype)
        acc[...] = jnp.zeros_like(acc)

    # Single fused matmul: (2TB, Dp) . (TC, Dp)^T -> (2TB, TC), f32 accumulate.
    # inv_t is already folded into zc, so the exp input needs no extra scale.
    s = lax.dot_general(a_s[...], zc_ref[...], (((1,), (1,)), ((), ())),
                        preferred_element_type=jnp.float32)
    acc[...] += jnp.sum(jnp.exp(s), axis=1, keepdims=True)

    @pl.when(c == pl.num_programs(1) - 1)
    def _finish():
        z = z_s[...]
        # Self-similarity term, recomputed from the SAME rounded operands that
        # fed the MXU (a_s and the bf16/f32 scaled column values), so the
        # subtraction cancels the accumulated diagonal contribution exactly.
        a_f = a_s[...].astype(jnp.float32)
        c_self = (z * inv_t).astype(a_s.dtype).astype(jnp.float32)
        self_term = jnp.exp(jnp.sum(a_f * c_self, axis=1, keepdims=True))
        # Zero-padded stacked columns each contribute exactly exp(0) = 1.
        denom = acc[...] - self_term - num_pad_cols
        logd = jnp.log(denom)
        # Positives: sim[r, r+B] == sim[r+B, r] == z_i[r] . z_j[r] (f32).
        pos = jnp.sum(z[0:TB, :] * z[TB:2 * TB, :], axis=1, keepdims=True)
        # Rows r and r+B share the positive; emit their combined contribution.
        loss_ref[...] = logd[0:TB, :] + logd[TB:2 * TB, :] - 2.0 * inv_t * pos


def contrastive_loss(emb_i, emb_j, temperature=0.5, matmul_dtype=jnp.bfloat16):
    """NT-Xent loss matching the PyTorch ContrastiveLoss.forward.

    matmul_dtype: MXU operand dtype. bf16 (default, fast path on v5e/v6e/v7x)
    or jnp.float32 for full-precision similarities.
    """
    assert emb_i.shape == emb_j.shape and emb_i.ndim == 2
    B, D = emb_i.shape
    f32 = jnp.float32
    mm_dtype = jnp.dtype(matmul_dtype)
    mm_bytes = mm_dtype.itemsize
    inv_t = float(1.0 / float(temperature))

    # ---- Tiling ------------------------------------------------------------
    Dp = _round_up(max(D, 1), 128)                 # lane-dense feature dim
    row_align = 16 if mm_bytes < 4 else 8          # bf16 native (16,128) tile
    TB = min(128, _round_up(B, row_align))
    Bp = _round_up(B, TB)
    # Prefer >=2 row tiles so the "parallel" axis can shard across v7x's
    # two TensorCores (no effect on single-TC v5e/v6e).
    if Bp // TB < 2 and B >= 2 * row_align:
        TB = _round_up((B + 1) // 2, row_align)
        Bp = _round_up(B, TB)
    R = Bp // TB

    # Reduction (column) tile: big, VMEM-budgeted, decoupled from TB.
    col_budget = 12 * (1 << 20)                    # col double-buffer + s/exp tiles
    per_col_row = 2 * Dp * mm_bytes + 4 * TB * 4
    TC = max(row_align, min(512, col_budget // per_col_row))
    TC = (TC // row_align) * row_align
    TC = min(TC, _round_up(2 * Bp, row_align))
    Hp = _round_up(2 * Bp, TC)                     # padded stacked column rows
    C = Hp // TC

    # ---- Wrapper-side normalization (fused with the padding copy) ----------
    zi = _normalize_rows(emb_i.astype(f32))
    zj = _normalize_rows(emb_j.astype(f32))
    zi_p = jnp.zeros((Bp, Dp), f32).at[:B, :D].set(zi)
    zj_p = jnp.zeros((Bp, Dp), f32).at[:B, :D].set(zj)
    # Stacked column stream: normalized, pre-scaled by 1/t, in matmul dtype.
    zc = jnp.zeros((Hp, Dp), mm_dtype)
    zc = zc.at[0:Bp, :].set((zi_p * inv_t).astype(mm_dtype))
    zc = zc.at[Bp:2 * Bp, :].set((zj_p * inv_t).astype(mm_dtype))

    # ---- VMEM budget (stay well under the v7x 64 MiB physical VMEM) --------
    vmem_need = (2 * 2 * TB * Dp * 4               # zi/zj row tiles, 2 buffers
                 + 2 * TC * Dp * mm_bytes          # column tiles, 2 buffers
                 + 2 * TB * Dp * (4 + mm_bytes)    # z_s + a_s scratch
                 + 2 * 2 * TB * TC * 4             # s / exp intermediates
                 + 8 * TB * 4)                     # acc + output
    vmem_limit = int(min(48 * (1 << 20), max(2 * vmem_need, 16 * (1 << 20))))

    kernel = functools.partial(_ntxent_kernel, inv_t=inv_t,
                               num_pad_cols=float(Hp - 2 * B))

    per_row = pl.pallas_call(
        kernel,
        out_shape=jax.ShapeDtypeStruct((Bp, 1), jnp.float32),
        grid_spec=pltpu.PrefetchScalarGridSpec(
            num_scalar_prefetch=0,
            grid=(R, C),
            in_specs=[
                pl.BlockSpec((TB, Dp), lambda r, c: (r, 0)),   # z_i row tile
                pl.BlockSpec((TB, Dp), lambda r, c: (r, 0)),   # z_j row tile
                pl.BlockSpec((TC, Dp), lambda r, c: (c, 0)),   # stacked columns
            ],
            out_specs=pl.BlockSpec((TB, 1), lambda r, c: (r, 0)),
            scratch_shapes=[
                pltpu.VMEM((2 * TB, Dp), jnp.float32),  # stacked normalized rows
                pltpu.VMEM((2 * TB, Dp), mm_dtype),     # MXU LHS (rounded)
                pltpu.VMEM((2 * TB, 1), jnp.float32),   # running exp row-sums
            ],
        ),
        compiler_params=pltpu.CompilerParams(
            dimension_semantics=("parallel", "arbitrary"),
            vmem_limit_bytes=vmem_limit),
    )(zi_p, zj_p, zc)

    # Tiny final reduction over valid rows (row r carries global rows r and r+B).
    return jnp.sum(per_row[:B, 0]) / (2.0 * B)


def _reference_loss(emb_i, emb_j, temperature=0.5):
    # Pure-JAX reference mirroring the PyTorch forward.
    def norm(x):
        n = jnp.sqrt(jnp.sum(x * x, axis=1, keepdims=True))
        return x / jnp.maximum(n, 1e-12)

    B = emb_i.shape[0]
    z = jnp.concatenate([norm(emb_i), norm(emb_j)], axis=0)
    sim = z @ z.T
    pos = jnp.concatenate([jnp.diagonal(sim, B), jnp.diagonal(sim, -B)], axis=0)
    neg_mask = 1.0 - jnp.eye(2 * B)
    denom = jnp.sum(neg_mask * jnp.exp(sim / temperature), axis=1)
    loss_partial = -jnp.log(jnp.exp(pos / temperature) / denom)
    return jnp.sum(loss_partial) / (2 * B)


if __name__ == "__main__":
    # Small shapes consistent with the module: batch_size=8, hidden=32.
    B, D = 8, 32
    key = jax.random.PRNGKey(0)
    k1, k2 = jax.random.split(key)
    emb_i = jax.random.normal(k1, (B, D), dtype=jnp.float32)
    emb_j = jax.random.normal(k2, (B, D), dtype=jnp.float32)

    ref = jax.block_until_ready(_reference_loss(emb_i, emb_j, 0.5))

    # Default path: bf16 MXU operands (fast path on all generations).
    loss_bf16 = jax.block_until_ready(contrastive_loss(emb_i, emb_j, temperature=0.5))
    np.testing.assert_allclose(np.asarray(loss_bf16), np.asarray(ref),
                               rtol=3e-2, atol=3e-2)

    # Opt-in f32 MXU operands: tight tolerance.
    loss_f32 = jax.block_until_ready(
        contrastive_loss(emb_i, emb_j, temperature=0.5, matmul_dtype=jnp.float32))
    np.testing.assert_allclose(np.asarray(loss_f32), np.asarray(ref),
                               rtol=1e-5, atol=1e-5)

    # Larger ragged case: multiple row tiles, multiple column tiles,
    # row/feature padding and the analytic pad corrections.
    B2, D2 = 300, 70
    k3, k4 = jax.random.split(jax.random.PRNGKey(1))
    e_i = jax.random.normal(k3, (B2, D2), dtype=jnp.float32)
    e_j = jax.random.normal(k4, (B2, D2), dtype=jnp.float32)
    ref2 = jax.block_until_ready(_reference_loss(e_i, e_j, 0.5))
    loss2 = jax.block_until_ready(
        contrastive_loss(e_i, e_j, temperature=0.5, matmul_dtype=jnp.float32))
    np.testing.assert_allclose(np.asarray(loss2), np.asarray(ref2),
                               rtol=1e-4, atol=1e-4)

    print("KERNEL_OK")
</pallas_src>

<mosaic_0001>
module attributes {stable_mosaic.version = 11 : i64} {
  func.func @_ntxent_kernel(%arg0: i32, %arg1: i32, %arg2: memref<16x128xf32, #tpu.memory_space<vmem>>, %arg3: memref<16x128xf32, #tpu.memory_space<vmem>>, %arg4: memref<32x128xbf16, #tpu.memory_space<vmem>>, %arg5: memref<16x1xf32, #tpu.memory_space<vmem>>, %arg6: memref<32x128xf32, #tpu.memory_space<vmem>>, %arg7: memref<32x128xbf16, #tpu.memory_space<vmem>>, %arg8: memref<32x1xf32, #tpu.memory_space<vmem>>) attributes {dimension_semantics = [#tpu.dimension_semantics<parallel>, #tpu.dimension_semantics<arbitrary>], iteration_bounds = array<i64: 1, 1>, scalar_prefetch = 0 : i64, scratch_operands = 3 : i64, tpu.core_type = #tpu.core_type<tc>, window_params = [{transform_indices = @transform_0, window_bounds = array<i64: 16, 128>}, {transform_indices = @transform_1, window_bounds = array<i64: 16, 128>}, {transform_indices = @transform_2, window_bounds = array<i64: 32, 128>}, {transform_indices = @transform_3, window_bounds = array<i64: 16, 1>}]} {
    %c0_i32 = arith.constant 0 : i32
    %0 = arith.cmpi eq, %arg1, %c0_i32 : i32
    %1 = arith.extui %0 : i1 to i32
    %c0_i32_0 = arith.constant 0 : i32
    %2 = arith.cmpi ne, %1, %c0_i32_0 : i32
    scf.if %2 {
      %c0_11 = arith.constant 0 : index
      %c0_12 = arith.constant 0 : index
      %15 = vector.load %arg2[%c0_11, %c0_12] : memref<16x128xf32, #tpu.memory_space<vmem>>, vector<16x128xf32>
      %c0_13 = arith.constant 0 : index
      %c0_14 = arith.constant 0 : index
      %16 = vector.load %arg3[%c0_13, %c0_14] : memref<16x128xf32, #tpu.memory_space<vmem>>, vector<16x128xf32>
      %c0_15 = arith.constant 0 : index
      %c0_16 = arith.constant 0 : index
      %17 = vector.load %arg6[%c0_15, %c0_16] : memref<32x128xf32, #tpu.memory_space<vmem>>, vector<16x128xf32>
      tpu.vector_store %arg6[%c0_15, %c0_16], %15 {strides = array<i32>} : memref<32x128xf32, #tpu.memory_space<vmem>>, vector<16x128xf32>,
      %c16 = arith.constant 16 : index
      %c0_17 = arith.constant 0 : index
      %18 = vector.load %arg6[%c16, %c0_17] : memref<32x128xf32, #tpu.memory_space<vmem>>, vector<16x128xf32>
      tpu.vector_store %arg6[%c16, %c0_17], %16 {strides = array<i32>} : memref<32x128xf32, #tpu.memory_space<vmem>>, vector<16x128xf32>,
      %19 = arith.truncf %15 : vector<16x128xf32> to vector<16x128xbf16>
      %c0_18 = arith.constant 0 : index
      %c0_19 = arith.constant 0 : index
      %20 = vector.load %arg7[%c0_18, %c0_19] : memref<32x128xbf16, #tpu.memory_space<vmem>>, vector<16x128xbf16>
      tpu.vector_store %arg7[%c0_18, %c0_19], %19 {strides = array<i32>} : memref<32x128xbf16, #tpu.memory_space<vmem>>, vector<16x128xbf16>,
      %21 = arith.truncf %16 : vector<16x128xf32> to vector<16x128xbf16>
      %c16_20 = arith.constant 16 : index
      %c0_21 = arith.constant 0 : index
      %22 = vector.load %arg7[%c16_20, %c0_21] : memref<32x128xbf16, #tpu.memory_space<vmem>>, vector<16x128xbf16>
      tpu.vector_store %arg7[%c16_20, %c0_21], %21 {strides = array<i32>} : memref<32x128xbf16, #tpu.memory_space<vmem>>, vector<16x128xbf16>,
      %cst_22 = arith.constant 0.000000e+00 : f32
      %23 = vector.broadcast %cst_22 : f32 to vector<32x1xf32>
      %c0_23 = arith.constant 0 : index
      %c0_24 = arith.constant 0 : index
      %24 = vector.load %arg8[%c0_23, %c0_24] : memref<32x1xf32, #tpu.memory_space<vmem>>, vector<32x1xf32>
      tpu.vector_store %arg8[%c0_23, %c0_24], %23 {strides = array<i32>} : memref<32x1xf32, #tpu.memory_space<vmem>>, vector<32x1xf32>,
    } else {
    }
    %c0 = arith.constant 0 : index
    %c0_1 = arith.constant 0 : index
    %3 = vector.load %arg7[%c0, %c0_1] : memref<32x128xbf16, #tpu.memory_space<vmem>>, vector<32x128xbf16>
    %c0_2 = arith.constant 0 : index
    %c0_3 = arith.constant 0 : index
    %4 = vector.load %arg4[%c0_2, %c0_3] : memref<32x128xbf16, #tpu.memory_space<vmem>>, vector<32x128xbf16>
    %cst = arith.constant dense<0.000000e+00> : vector<32x32xf32>
    %5 = tpu.matmul %3, %4, %cst {dimension_numbers = #tpu.dot_dimension_numbers<[1], [1], [0], [0], [0, 0, 1, 0], [], []>} : vector<32x128xbf16>, vector<32x128xbf16>, vector<32x32xf32> -> vector<32x32xf32>
    %c0_4 = arith.constant 0 : index
    %c0_5 = arith.constant 0 : index
    %6 = vector.load %arg8[%c0_4, %c0_5] : memref<32x1xf32, #tpu.memory_space<vmem>>, vector<32x1xf32>
    %7 = math.exp %5 : vector<32x32xf32>
    %cst_6 = arith.constant dense<0.000000e+00> : vector<32xf32>
    %8 = vector.multi_reduction <add>, %7, %cst_6 [1] : vector<32x32xf32> to vector<32xf32>
    %9 = vector.shape_cast %8 : vector<32xf32> to vector<32x1xf32>
    %10 = arith.addf %6, %9 : vector<32x1xf32>
    %c0_7 = arith.constant 0 : index
    %c0_8 = arith.constant 0 : index
    %11 = vector.load %arg8[%c0_7, %c0_8] : memref<32x1xf32, #tpu.memory_space<vmem>>, vector<32x1xf32>
    tpu.vector_store %arg8[%c0_7, %c0_8], %10 {strides = array<i32>} : memref<32x1xf32, #tpu.memory_space<vmem>>, vector<32x1xf32>,
    %c0_i32_9 = arith.constant 0 : i32
    %12 = arith.cmpi eq, %arg1, %c0_i32_9 : i32
    %13 = arith.extui %12 : i1 to i32
    %c0_i32_10 = arith.constant 0 : i32
    %14 = arith.cmpi ne, %13, %c0_i32_10 : i32
    scf.if %14 {
      %c0_11 = arith.constant 0 : index
      %c0_12 = arith.constant 0 : index
      %15 = vector.load %arg6[%c0_11, %c0_12] : memref<32x128xf32, #tpu.memory_space<vmem>>, vector<32x128xf32>
      %c0_13 = arith.constant 0 : index
      %c0_14 = arith.constant 0 : index
      %16 = vector.load %arg7[%c0_13, %c0_14] : memref<32x128xbf16, #tpu.memory_space<vmem>>, vector<32x128xbf16>
      %17 = arith.extf %16 : vector<32x128xbf16> to vector<32x128xf32>
      %cst_15 = arith.constant 2.000000e+00 : f32
      %18 = vector.broadcast %cst_15 : f32 to vector<32x128xf32>
      %19 = arith.mulf %15, %18 : vector<32x128xf32>
      %20 = arith.truncf %19 : vector<32x128xf32> to vector<32x128xbf16>
      %21 = arith.extf %20 : vector<32x128xbf16> to vector<32x128xf32>
      %22 = arith.mulf %17, %21 : vector<32x128xf32>
      %cst_16 = arith.constant dense<0.000000e+00> : vector<32xf32>
      %23 = vector.multi_reduction <add>, %22, %cst_16 [1] : vector<32x128xf32> to vector<32xf32>
      %24 = vector.shape_cast %23 : vector<32xf32> to vector<32x1xf32>
      %25 = math.exp %24 : vector<32x1xf32>
      %c0_17 = arith.constant 0 : index
      %c0_18 = arith.constant 0 : index
      %26 = vector.load %arg8[%c0_17, %c0_18] : memref<32x1xf32, #tpu.memory_space<vmem>>, vector<32x1xf32>
      %27 = arith.subf %26, %25 : vector<32x1xf32>
      %cst_19 = arith.constant 1.600000e+01 : f32
      %28 = vector.broadcast %cst_19 : f32 to vector<32x1xf32>
      %29 = arith.subf %27, %28 : vector<32x1xf32>
      %30 = math.log %29 : vector<32x1xf32>
      %31 = vector.extract_strided_slice %15 {offsets = [0, 0], sizes = [16, 128], strides = [1, 1]} : vector<32x128xf32> to vector<16x128xf32>
      %32 = vector.extract_strided_slice %15 {offsets = [16, 0], sizes = [16, 128], strides = [1, 1]} : vector<32x128xf32> to vector<16x128xf32>
      %33 = arith.mulf %31, %32 : vector<16x128xf32>
      %cst_20 = arith.constant dense<0.000000e+00> : vector<16xf32>
      %34 = vector.multi_reduction <add>, %33, %cst_20 [1] : vector<16x128xf32> to vector<16xf32>
      %35 = vector.shape_cast %34 : vector<16xf32> to vector<16x1xf32>
      %36 = vector.extract_strided_slice %30 {offsets = [0, 0], sizes = [16, 1], strides = [1, 1]} : vector<32x1xf32> to vector<16x1xf32>
      %37 = vector.extract_strided_slice %30 {offsets = [16, 0], sizes = [16, 1], strides = [1, 1]} : vector<32x1xf32> to vector<16x1xf32>
      %38 = arith.addf %36, %37 : vector<16x1xf32>
      %cst_21 = arith.constant 4.000000e+00 : f32
      %39 = vector.broadcast %cst_21 : f32 to vector<16x1xf32>
      %40 = arith.mulf %39, %35 : vector<16x1xf32>
      %41 = arith.subf %38, %40 : vector<16x1xf32>
      %c0_22 = arith.constant 0 : index
      %c0_23 = arith.constant 0 : index
      %42 = vector.load %arg5[%c0_22, %c0_23] : memref<16x1xf32, #tpu.memory_space<vmem>>, vector<16x1xf32>
      tpu.vector_store %arg5[%c0_22, %c0_23], %41 {strides = array<i32>} : memref<16x1xf32, #tpu.memory_space<vmem>>, vector<16x1xf32>,
    } else {
    }
    return
  }
  func.func @transform_0(%arg0: i32, %arg1: i32) -> (i32, i32) {
    %c0_i32 = arith.constant 0 : i32
    %c0_i32_0 = arith.constant 0 : i32
    return %arg0, %c0_i32 : i32, i32
  }
  func.func @transform_1(%arg0: i32, %arg1: i32) -> (i32, i32) {
    %c0_i32 = arith.constant 0 : i32
    %c0_i32_0 = arith.constant 0 : i32
    return %arg0, %c0_i32 : i32, i32
  }
  func.func @transform_2(%arg0: i32, %arg1: i32) -> (i32, i32) {
    %c0_i32 = arith.constant 0 : i32
    %c0_i32_0 = arith.constant 0 : i32
    return %arg1, %c0_i32 : i32, i32
  }
  func.func @transform_3(%arg0: i32, %arg1: i32) -> (i32, i32) {
    %c0_i32 = arith.constant 0 : i32
    %c0_i32_0 = arith.constant 0 : i32
    return %arg0, %c0_i32 : i32, i32
  }
}

</mosaic_0001>

<llo_original>
// kernel: tpu_custom_call.1
$region0: #{tpu_custom_call.1}
  #allocation0 [shape = 'u32[]', space=smem, size = 0x4, offset = 0x4, fixed_abs, tag = 'smem constant byte address 0x4 - core index']
  #allocation1 [shape = 'u32[144,128]{1,0:T(1,128)}', space=vmem, size = 0x12000, scoped, tag = 'internal scratch']
  #allocation2 [shape = 'f32[32,128]{1,0:T(8,128)}', space=vmem, size = 0x4000, scoped, tag = 'scratch operand']
  #allocation3 [shape = 'bf16[32,128]{1,0:T(8,128)(2,1)}', space=vmem, size = 0x2000, scoped, tag = 'scratch operand']
  #allocation4 [shape = 'f32[32,1]{1,0:T(8,128)}', space=vmem, size = 0x4000, scoped, tag = 'scratch operand']
  %s0 = inlined_call_operand.hbm [shape: f32[16,128], index: 0, kind: input, shape index: {}]
  %s1 = inlined_call_operand.hbm [shape: f32[16,128], index: 1, kind: input, shape index: {}]
  %s2 = inlined_call_operand.hbm [shape: bf16[32,128], index: 2, kind: input, shape index: {}]
  %s3 = inlined_call_operand.vmem [shape: f32[16,1], index: 3, kind: output, shape index: {}]
  %s4 = sld [smem:[#allocation0]]
  $region42: #{tpu_custom_call.1} parent=0
    _
  %s6 = ssub.s32 1, %s4
  %s7 = scalar_select 0, %s6, %s4
  $region1: #{tpu_custom_call.1} parent=0
    #allocation5 [shape = 'u8[8192]{0}', space=vmem, size = 0x2000, scoped, tag = 'input window, operand 0, single buffered']
    #allocation6 [shape = 's32[1]{0}', space=sflag, size = 0x4, scoped, tag = 'scoped memory for tpu_custom_call.1']
    #allocation7 [shape = 'u8[8192]{0}', space=vmem, size = 0x2000, scoped, tag = 'input window, operand 1, single buffered']
    #allocation8 [shape = 's32[1]{0}', space=sflag, size = 0x4, scoped, tag = 'scoped memory for tpu_custom_call.1']
    #allocation9 [shape = 'u8[8192]{0}', space=vmem, size = 0x2000, scoped, tag = 'input window, operand 2, single buffered']
    %8 = vsyncpa [#allocation6], 0
    %9 = vsyncpa [#allocation8], 0
    // Predicated region
    $region2: #{tpu_custom_call.1} parent=1 // pred_check
      _
    $region3: #{tpu_custom_call.1} parent=1 // pred_check_branch
      %11 = sbr.rel (0) target = $region5
    $region4: #{tpu_custom_call.1} parent=1 // pred_region
      %s13 = ssub.s32 256, 256
      %14 = vsyncadd [#allocation6], %s13
      %s15 = sshll.u32 [#allocation5], 4
      %s16 = int_to_ptr.vmem [resolvable:$true] %s15
      %21 = dma.hbm_to_vmem [thread:$0]  %s0, 256, %s16, [#allocation6], 128, 128, 8
    $region5: #{tpu_custom_call.1} parent=1 // pred_fallthru
      _
    // Predicated region
    $region6: #{tpu_custom_call.1} parent=1 // pred_check
      _
    $region7: #{tpu_custom_call.1} parent=1 // pred_check_branch
      %23 = sbr.rel (0) target = $region9
    $region8: #{tpu_custom_call.1} parent=1 // pred_region
      %s25 = ssub.s32 256, 256
      %26 = vsyncadd [#allocation8], %s25
      %s27 = sshll.u32 [#allocation7], 4
      %s28 = int_to_ptr.vmem [resolvable:$true] %s27
      %33 = dma.hbm_to_vmem [thread:$0]  %s1, 256, %s28, [#allocation8], 128, 128, 8
    $region9: #{tpu_custom_call.1} parent=1 // pred_fallthru
      _
    // Predicated region
    $region10: #{tpu_custom_call.1} parent=1 // pred_check
      _
    $region11: #{tpu_custom_call.1} parent=1 // pred_check_branch
      %35 = sbr.rel (0) target = $region13
    $region12: #{tpu_custom_call.1} parent=1 // pred_region
      %s37 = ssub.s32 256, 256
      %38 = vsyncadd [#allocation8], %s37
      %s39 = sshll.u32 [#allocation9], 4
      %s40 = int_to_ptr.vmem [resolvable:$true] %s39
      %45 = dma.hbm_to_vmem [thread:$0]  %s2, 256, %s40, [#allocation8], 64, 64, 4
    $region13: #{tpu_custom_call.1} parent=1 // pred_fallthru
      _
    // Predicated region
    $region14: #{tpu_custom_call.1} parent=1 // pred_check
      _
    $region15: #{tpu_custom_call.1} parent=1 // pred_check_branch
      %47 = sbr.rel (0) target = $region17
    $region16: #{tpu_custom_call.1} parent=1 // pred_region
      %48 = dma.done [#allocation6], 256
    $region17: #{tpu_custom_call.1} parent=1 // pred_fallthru
      _
    // Predicated region
    $region18: #{tpu_custom_call.1} parent=1 // pred_check
      _
    $region19: #{tpu_custom_call.1} parent=1 // pred_check_branch
      %50 = sbr.rel (0) target = $region21
    $region20: #{tpu_custom_call.1} parent=1 // pred_region
      %51 = dma.done [#allocation8], 256
    $region21: #{tpu_custom_call.1} parent=1 // pred_fallthru
      _
    // Predicated region
    $region22: #{tpu_custom_call.1} parent=1 // pred_check
      _
    $region23: #{tpu_custom_call.1} parent=1 // pred_check_branch
      %53 = sbr.rel (0) target = $region25
    $region24: #{tpu_custom_call.1} parent=1 // pred_region
      %54 = dma.done [#allocation8], 256
    $region25: #{tpu_custom_call.1} parent=1 // pred_fallthru
      _
    %p56 = scmp.eq.s32.totalorder 0, 0
    // Predicated region
    $region26: #{tpu_custom_call.1} parent=1 // pred_check
      %p57 = pneg %p56
    $region27: #{tpu_custom_call.1} parent=1 // pred_check_branch
      %59 = sbr.rel (%p57) target = $region29
    $region28: #{tpu_custom_call.1} parent=1 // pred_region
      %v60 = vld [vmem:[#allocation5] sm:$0xff]
      %v61 = vld [vmem:[#allocation5 + $0x8] sm:$0xff]
      %v62 = vld [vmem:[#allocation7] sm:$0xff]
      %v63 = vld [vmem:[#allocation7 + $0x8] sm:$0xff]
      %64 = vst [vmem:[#allocation2] sm:$0xff] %v60
      %65 = vst [vmem:[#allocation2 + $0x8] sm:$0xff] %v61
      %66 = vst [vmem:[#allocation2 + $0x10] sm:$0xff] %v62
      %67 = vst [vmem:[#allocation2 + $0x18] sm:$0xff] %v63
      %v68 = vpack.c.bf16 %v61, %v60
      %v70 = vunpack.c.l.b16 %v68
      %v71 = vunpack.c.h.b16 %v68
      %v72 = vpack.c.b16 %v70, %v70
      %v73 = vpack.c.b16 %v71, %v71
      %76 = vst [vmem:[#allocation3] sm:$0xf] %v72
      %77 = vst [vmem:[#allocation3 + $0x4] sm:$0xf] %v73
      %v78 = vpack.c.bf16 %v63, %v62
      %v80 = vunpack.c.l.b16 %v78
      %v81 = vunpack.c.h.b16 %v78
      %v82 = vpack.c.b16 %v80, %v80
      %v83 = vpack.c.b16 %v81, %v81
      %86 = vst [vmem:[#allocation3 + $0x8] sm:$0xf] %v82
      %87 = vst [vmem:[#allocation3 + $0xc] sm:$0xf] %v83
      %vm88 = vcmask 7168
      %89 = vst.msk [vmem:[#allocation4] sm:$0xff] %vm88, 0.0
      %90 = vst.msk [vmem:[#allocation4 + $0x8] sm:$0xff] %vm88, 0.0
      %91 = vst.msk [vmem:[#allocation4 + $0x10] sm:$0xff] %vm88, 0.0
      %92 = vst.msk [vmem:[#allocation4 + $0x18] sm:$0xff] %vm88, 0.0
    $region29: #{tpu_custom_call.1} parent=1 // pred_fallthru
      _
    %v93 = vld [vmem:[#allocation3] sm:$0xf]
    %v94 = vld [vmem:[#allocation3 + $0x4] sm:$0xf]
    %v95 = vld [vmem:[#allocation3 + $0x8] sm:$0xf]
    %v96 = vld [vmem:[#allocation3 + $0xc] sm:$0xf]
    %v97 = vld [vmem:[#allocation9] sm:$0xf]
    %v98 = vld [vmem:[#allocation9 + $0x4] sm:$0xf]
    %v99 = vld [vmem:[#allocation9 + $0x8] sm:$0xf]
    %v100 = vld [vmem:[#allocation9 + $0xc] sm:$0xf]
    %v105 = vunpack.c.l.b16 %v93
    %v106 = vunpack.c.l.b16 %v94
    %v107 = vunpack.c.l.b16 %v95
    %v108 = vunpack.c.l.b16 %v96
    %v109 = vpack.c.b16 %v106, %v105
    %v110 = vpack.c.b16 %v108, %v107
    %v117 = vunpack.c.l.b16 %v97
    %v118 = vunpack.c.l.b16 %v98
    %v119 = vunpack.c.l.b16 %v99
    %v120 = vunpack.c.l.b16 %v100
    %v121 = vpack.c.b16 %v118, %v117
    %v122 = vpack.c.b16 %v120, %v119
    %125 = vmatprep.subr.bf16.mxu0 0
    %126 = vmatpush1.bf16.xpose.msra.mxu0 0
    %127 = vmatprep.subr.bf16.mxu0 0
    %128 = vmatpush1.bf16.xpose.msra.mxu0 0
    %129 = vmatprep.subr.bf16.mxu0 0
    %130 = vmatpush1.bf16.xpose.msra.mxu0 0
    %131 = vmatprep.subr.bf16.mxu0 0
    %132 = vmatpush1.bf16.xpose.msra.mxu0 0
    %133 = vmatprep.subr.bf16.mxu0 0
    %134 = vmatpush1.bf16.xpose.msra.mxu0 0
    %135 = vmatprep.subr.bf16.mxu0 0
    %136 = vmatpush1.bf16.xpose.msra.mxu0 0
    %137 = vmatprep.subr.bf16.mxu0 0
    %138 = vmatpush1.bf16.xpose.msra.mxu0 %v122
    %139 = vmatprep.subr.bf16.mxu0 0
    %140 = vmatpush1.bf16.xpose.msra.mxu0 %v121
    %141 = vmatprep.subr.bf16.mxu0 0
    %142 = vmatpush2.bf16.xpose.msra.mxu0 0
    %143 = vmatprep.subr.bf16.mxu0 0
    %144 = vmatpush2.bf16.xpose.msra.mxu0 0
    %145 = vmatprep.subr.bf16.mxu0 0
    %146 = vmatpush2.bf16.xpose.msra.mxu0 0
    %147 = vmatprep.subr.bf16.mxu0 0
    %148 = vmatpush2.bf16.xpose.msra.mxu0 0
    %149 = vmatprep.subr.bf16.mxu0 0
    %150 = vmatpush2.bf16.xpose.msra.mxu0 0
    %151 = vmatprep.subr.bf16.mxu0 0
    %152 = vmatpush2.bf16.xpose.msra.mxu0 0
    %153 = vmatprep.subr.bf16.mxu0 0
    %154 = vmatpush2.bf16.xpose.msra.mxu0 0
    %155 = vmatprep.subr.bf16.mxu0 0
    %156 = vmatpush2.bf16.xpose.msra.mxu0 0
    %157 = vmatprep.mubr.bf16.mxu0 0
    %158 = vmatmul.mubr.bf16.gmra.mxu0 %v109
    %v159 = vpop.f32.mrf.mxu0
    %v160 = vadd.f32 0.0, %v159
    %v161 = vpop.f32.mrf.mxu0
    %v162 = vpop.f32.mrf.mxu0
    %v163 = vadd.f32 0.0, %v162
    %v164 = vpop.f32.mrf.mxu0
    %165 = vmatprep.mubr.bf16.mxu0 0
    %166 = vmatmul.mubr.bf16.gmra.mxu0 %v110
    %v167 = vpop.f32.mrf.mxu0
    %v168 = vadd.f32 0.0, %v167
    %v169 = vpop.f32.mrf.mxu0
    %v170 = vpop.f32.mrf.mxu0
    %v171 = vadd.f32 0.0, %v170
    %v172 = vpop.f32.mrf.mxu0
    %173 = vdwg.mxu0
    %v174 = vld [vmem:[#allocation4] sm:$0xff]
    %v175 = vld [vmem:[#allocation4 + $0x8] sm:$0xff]
    %v176 = vld [vmem:[#allocation4 + $0x10] sm:$0xff]
    %v177 = vld [vmem:[#allocation4 + $0x18] sm:$0xff]
    %v178 = vmul.f32 %v160, 1.442695
    %v179 = vpow.pop %v178
    %v180 = vmul.f32 %v163, 1.442695
    %v181 = vpow.pop %v180
    %v182 = vmul.f32 %v168, 1.442695
    %v183 = vpow.pop %v182
    %v184 = vmul.f32 %v171, 1.442695
    %v185 = vpow.pop %v184
    %vm186 = vcmask 261120
    %v187 = vsel %vm186, %v179, 0.0
    %188 = vadd.xlane.f32.xlu0 %v187
    %v189 = vpop.xlane.xlu0 %188
    %v190 = vsel %vm186, %v181, 0.0
    %191 = vadd.xlane.f32.xlu0 %v190
    %v192 = vpop.xlane.xlu0 %191
    %v193 = vsel %vm186, %v183, 0.0
    %194 = vadd.xlane.f32.xlu0 %v193
    %v195 = vpop.xlane.xlu0 %194
    %v196 = vsel %vm186, %v185, 0.0
    %197 = vadd.xlane.f32.xlu0 %v196
    %v198 = vpop.xlane.xlu0 %197
    %v199 = vadd.f32 %v174, %v189
    %v200 = vadd.f32 %v175, %v192
    %v201 = vadd.f32 %v176, %v195
    %v202 = vadd.f32 %v177, %v198
    %vm203 = vcmask 7168
    %204 = vst.msk [vmem:[#allocation4] sm:$0xff] %vm203, %v199
    %205 = vst.msk [vmem:[#allocation4 + $0x8] sm:$0xff] %vm203, %v200
    %206 = vst.msk [vmem:[#allocation4 + $0x10] sm:$0xff] %vm203, %v201
    %207 = vst.msk [vmem:[#allocation4 + $0x18] sm:$0xff] %vm203, %v202
    // Predicated region
    $region30: #{tpu_custom_call.1} parent=1 // pred_check
      %p208 = pneg %p56
    $region31: #{tpu_custom_call.1} parent=1 // pred_check_branch
      %210 = sbr.rel (%p208) target = $region33
    $region32: #{tpu_custom_call.1} parent=1 // pred_region
      %v211 = vld [vmem:[#allocation2] sm:$0xff]
      %v212 = vld [vmem:[#allocation2 + $0x8] sm:$0xff]
      %v213 = vld [vmem:[#allocation2 + $0x10] sm:$0xff]
      %v214 = vld [vmem:[#allocation2 + $0x18] sm:$0xff]
      %v215 = vld [vmem:[#allocation3] sm:$0xf]
      %v216 = vld [vmem:[#allocation3 + $0x4] sm:$0xf]
      %v217 = vld [vmem:[#allocation3 + $0x8] sm:$0xf]
      %v218 = vld [vmem:[#allocation3 + $0xc] sm:$0xf]
      %v219 = vunpack.c.l.bf16 %v215
      %v220 = vunpack.c.l.bf16 %v216
      %v221 = vunpack.c.l.bf16 %v217
      %v222 = vunpack.c.l.bf16 %v218
      %v223 = vmul.f32 %v211, 2.0
      %v224 = vmul.f32 %v212, 2.0
      %v225 = vmul.f32 %v213, 2.0
      %v226 = vmul.f32 %v214, 2.0
      %v227 = vpack.c.bf16 %v224, %v223
      %v228 = vpack.c.bf16 %v226, %v225
      %v229 = vunpack.c.l.bf16 %v227
      %v230 = vunpack.c.h.bf16 %v227
      %v231 = vunpack.c.l.bf16 %v228
      %v232 = vunpack.c.h.bf16 %v228
      %v233 = vmul.f32 %v219, %v229
      %v234 = vmul.f32 %v220, %v230
      %v235 = vmul.f32 %v221, %v231
      %v236 = vmul.f32 %v222, %v232
      %237 = vadd.xlane.f32.xlu0 %v233
      %v238 = vpop.xlane.xlu0 %237
      %239 = vadd.xlane.f32.xlu0 %v234
      %v240 = vpop.xlane.xlu0 %239
      %241 = vadd.xlane.f32.xlu0 %v235
      %v242 = vpop.xlane.xlu0 %241
      %243 = vadd.xlane.f32.xlu0 %v236
      %v244 = vpop.xlane.xlu0 %243
      %v245 = vmul.f32 %v238, 1.442695
      %v246 = vpow.pop %v245
      %v247 = vmul.f32 %v240, 1.442695
      %v248 = vpow.pop %v247
      %v249 = vmul.f32 %v242, 1.442695
      %v250 = vpow.pop %v249
      %v251 = vmul.f32 %v244, 1.442695
      %v252 = vpow.pop %v251
      %v253 = vld [vmem:[#allocation4] sm:$0xff]
      %v254 = vld [vmem:[#allocation4 + $0x8] sm:$0xff]
      %v255 = vld [vmem:[#allocation4 + $0x10] sm:$0xff]
      %v256 = vld [vmem:[#allocation4 + $0x18] sm:$0xff]
      %v257 = vsub.f32 %v253, %v246
      %v258 = vsub.f32 %v254, %v248
      %v259 = vsub.f32 %v255, %v250
      %v260 = vsub.f32 %v256, %v252
      %v261 = vsub.f32 %v257, 16.0
      %v262 = vsub.f32 %v258, 16.0
      %v263 = vsub.f32 %v259, 16.0
      %v264 = vsub.f32 %v260, 16.0
      %v265 = vlog2.pop %v261
      %v266 = vmul.f32 %v265, 0.6931472
      %v267 = vlog2.pop %v262
      %v268 = vmul.f32 %v267, 0.6931472
      %v269 = vlog2.pop %v263
      %v270 = vmul.f32 %v269, 0.6931472
      %v271 = vlog2.pop %v264
      %v272 = vmul.f32 %v271, 0.6931472
      %v273 = vmul.f32 %v211, %v213
      %v274 = vmul.f32 %v212, %v214
      %275 = vadd.xlane.f32.xlu0 %v273
      %v276 = vpop.xlane.xlu0 %275
      %277 = vadd.xlane.f32.xlu0 %v274
      %v278 = vpop.xlane.xlu0 %277
      %v279 = vadd.f32 %v266, %v270
      %v280 = vadd.f32 %v268, %v272
      %v281 = vmul.f32 %v276, 4.0
      %v282 = vmul.f32 %v278, 4.0
      %v283 = vsub.f32 %v279, %v281
      %v284 = vsub.f32 %v280, %v282
      %285 = vst.msk [vmem:[%s3] sm:$0xff] %vm203, %v283
      %286 = vst.msk [vmem:[%s3 + $0x8] sm:$0xff] %vm203, %v284
    $region33: #{tpu_custom_call.1} parent=1 // pred_fallthru
      _
    // Predicated region
    $region34: #{tpu_custom_call.1} parent=1 // pred_check
      _
    $region35: #{tpu_custom_call.1} parent=1 // pred_check_branch
      %288 = sbr.rel (0) target = $region37
    $region36: #{tpu_custom_call.1} parent=1 // pred_region
      _
    $region37: #{tpu_custom_call.1} parent=1 // pred_fallthru
      _
    // Predicated region
    $region38: #{tpu_custom_call.1} parent=1 // pred_check
      _
    $region39: #{tpu_custom_call.1} parent=1 // pred_check_branch
      %290 = sbr.rel (0) target = $region41
    $region40: #{tpu_custom_call.1} parent=1 // pred_region
      _
    $region41: #{tpu_custom_call.1} parent=1 // pred_fallthru
      _
    %291 = vsyncpa [#allocation6], 1
    %292 = vsyncpa [#allocation8], 1

</llo_original>
